<compile_context>
chip_gen: v5e
topology: v5e:2x2
jax: 0.10.0
libtpu: 0.0.40
codegen_flags: <defaults>
</compile_context>

<pallas_src>
import functools

import jax
import jax.numpy as jnp
from jax import lax
from jax.experimental import pallas as pl
from jax.experimental.pallas import tpu as pltpu

LANES = 128
_VMEM_BUDGET_BYTES = 20 * 1024 * 1024  # keep well under the 32 MiB scoped limit


def _dice_sums_kernel(x_ref, t_ref, o_ref, acc_i, acc_z, acc_y, *,
                      n_classes, rows_tile, rt_per_chunk, pr_rows,
                      apply_softmax, needs_mask):
    """Fused per-block dice partial sums.

    x_ref : (1, C, TR, 128) f32  scores for ALL classes of this pixel tile
    t_ref : (1, 1, TR, 128) i32  integer labels for this pixel tile
    o_ref : (1, 3, C, 128) f32   per-chunk partial sums [intersect, z, y]
    acc_* : (C, TR, 128) f32     VMEM accumulators (persist across grid steps)
    """
    chunk = pl.program_id(0)
    b = pl.program_id(1)
    r = pl.program_id(2)

    # Zero accumulators at the start of every chunk.
    @pl.when((b == 0) & (r == 0))
    def _init():
        acc_i[...] = jnp.zeros_like(acc_i)
        acc_z[...] = jnp.zeros_like(acc_z)
        acc_y[...] = jnp.zeros_like(acc_y)

    x = x_ref[0]          # (C, TR, 128) float32
    t = t_ref[0]          # (1, TR, 128) int32

    if apply_softmax:
        # Per-pixel softmax over the class dim (a leading dim -> pure VALU,
        # exp on the EUP).  Matches jax.nn.softmax numerics (exact division).
        m = jnp.max(x, axis=0, keepdims=True)
        e = jnp.exp(x - m)
        s = e / jnp.sum(e, axis=0, keepdims=True)
    else:
        s = x

    # On-the-fly one-hot of the integer labels against all classes at once.
    class_ids = lax.broadcasted_iota(jnp.int32, (n_classes, 1, LANES), 0)
    eq = (t == class_ids)                                  # (C, TR, 128) bool

    if needs_mask:
        # Ragged tail: rows past the true pixel extent contain clipped-DMA
        # garbage; mask both the scores and the one-hot.
        row_ids = lax.broadcasted_iota(jnp.int32, (1, rows_tile, LANES), 1)
        gtile = chunk * rt_per_chunk + r
        valid = (gtile * rows_tile + row_ids) < pr_rows    # (1, TR, 128)
        s = jnp.where(valid, s, 0.0)
        eq = jnp.logical_and(eq, valid)

    oh = eq.astype(jnp.float32)
    # Pure element-wise accumulation (VALU only) -- pipelines under the DMA.
    acc_i[...] += s * oh
    acc_z[...] += s * s
    acc_y[...] += oh

    # Final cross-sublane reduction happens exactly once per chunk.
    @pl.when((b == pl.num_programs(1) - 1) & (r == pl.num_programs(2) - 1))
    def _final():
        o_ref[0, 0] = jnp.sum(acc_i[...], axis=1)          # (C, 128)
        o_ref[0, 1] = jnp.sum(acc_z[...], axis=1)
        o_ref[0, 2] = jnp.sum(acc_y[...], axis=1)


@functools.partial(jax.jit, static_argnames=("n_classes", "softmax"))
def dice_loss(inputs, target, n_classes, weight=None, softmax=False):
    """Reproduces DiceLoss.forward (returns the scalar loss)."""
    B, C, H, W = inputs.shape
    assert C == n_classes
    assert target.shape == (B, H, W)

    P = H * W
    x = inputs.astype(jnp.float32).reshape(B, C, P)     # free reshape (no transpose)
    t = target.astype(jnp.int32).reshape(B, 1, P)

    lane_pad = (-P) % LANES
    if lane_pad:
        # TODO(synk): only hit when H*W is not a multiple of 128; costs one pad copy.
        x = jnp.pad(x, ((0, 0), (0, 0), (0, lane_pad)))                     # zeros: no effect
        t = jnp.pad(t, ((0, 0), (0, 0), (0, lane_pad)), constant_values=-1)  # never matches a class
    Pp = P + lane_pad
    Pr = Pp // LANES
    x = x.reshape(B, C, Pr, LANES)
    t = t.reshape(B, 1, Pr, LANES)

    # --- tile sizing: big pixel tiles, budgeted against VMEM ---------------
    # per TR row: 2x double-buffered x (2C) + double-buffered t (2) + 3 accs (3C)
    bytes_per_row = (5 * C + 2) * LANES * 4
    tr_cap = max(8, ((_VMEM_BUDGET_BYTES // bytes_per_row) // 8) * 8)
    tr_target = min(1024, tr_cap)
    TR = Pr if Pr <= tr_target else tr_target            # TR == Pr or multiple of 8
    n_tiles = pl.cdiv(Pr, TR)
    NCHUNK = min(2, n_tiles)                             # pixel chunks (megacore)
    RT = pl.cdiv(n_tiles, NCHUNK)                        # row-tiles per chunk
    needs_mask = (NCHUNK * RT * TR != Pr)

    def x_map(chunk, b, r):
        return (b, 0, jnp.minimum(chunk * RT + r, n_tiles - 1), 0)

    def t_map(chunk, b, r):
        return (b, 0, jnp.minimum(chunk * RT + r, n_tiles - 1), 0)

    def o_map(chunk, b, r):
        return (chunk, 0, 0, 0)

    kernel = functools.partial(
        _dice_sums_kernel,
        n_classes=C, rows_tile=TR, rt_per_chunk=RT, pr_rows=Pr,
        apply_softmax=bool(softmax), needs_mask=needs_mask)

    partial_sums = pl.pallas_call(
        kernel,
        out_shape=jax.ShapeDtypeStruct((NCHUNK, 3, C, LANES), jnp.float32),
        grid_spec=pltpu.PrefetchScalarGridSpec(
            num_scalar_prefetch=0,
            grid=(NCHUNK, B, RT),
            in_specs=[
                pl.BlockSpec((1, C, TR, LANES), x_map),
                pl.BlockSpec((1, 1, TR, LANES), t_map),
            ],
            out_specs=pl.BlockSpec((1, 3, C, LANES), o_map),
            scratch_shapes=[
                pltpu.VMEM((C, TR, LANES), jnp.float32),
                pltpu.VMEM((C, TR, LANES), jnp.float32),
                pltpu.VMEM((C, TR, LANES), jnp.float32),
            ],
        ),
        compiler_params=pltpu.CompilerParams(
            dimension_semantics=("parallel", "arbitrary", "arbitrary"),
            vmem_limit_bytes=32 * 1024 * 1024,
        ),
    )(x, t)

    # Tiny final reduction over chunks and the 128 lanes.
    sums = jnp.sum(partial_sums, axis=(0, 3))            # (3, C)
    intersect, z_sum, y_sum = sums[0], sums[1], sums[2]

    smooth = 1e-05
    dice = 1.0 - (2.0 * intersect + smooth) / (z_sum + y_sum + smooth)

    if weight is None:
        w = jnp.ones((n_classes,), jnp.float32)
    else:
        w = jnp.asarray(weight, jnp.float32)

    return jnp.sum(dice * w) / n_classes


def _reference(inputs, target, n_classes, weight=None, softmax=False):
    """Pure-JAX reference matching the PyTorch DiceLoss module."""
    if softmax:
        inputs = jax.nn.softmax(inputs, axis=1)
    onehot = (target[:, None, :, :] ==
              jnp.arange(n_classes)[None, :, None, None]).astype(jnp.float32)
    smooth = 1e-05
    if weight is None:
        weight = [1.0] * n_classes
    loss = 0.0
    for i in range(n_classes):
        s = inputs[:, i]
        tt = onehot[:, i]
        inter = jnp.sum(s * tt)
        y = jnp.sum(tt * tt)
        z = jnp.sum(s * s)
        d = 1.0 - (2 * inter + smooth) / (z + y + smooth)
        loss = loss + d * weight[i]
    return loss / n_classes


if __name__ == "__main__":
    key = jax.random.PRNGKey(0)
    k1, k2 = jax.random.split(key)

    B, C, H, W = 2, 4, 16, 16
    inputs = jax.random.normal(k1, (B, C, H, W), dtype=jnp.float32)       # logits, NCHW
    target = jax.random.randint(k2, (B, H, W), 0, C, dtype=jnp.int32)     # class labels

    out = dice_loss(inputs, target, n_classes=C, softmax=True)
    out = jax.block_until_ready(out)

    ref = _reference(inputs, target, n_classes=C, softmax=True)
    assert jnp.allclose(out, ref, atol=1e-5, rtol=1e-5), (out, ref)

    print("KERNEL_OK")
</pallas_src>

<mosaic_0001>
module attributes {stable_mosaic.version = 11 : i64} {
  func.func @_dice_sums_kernel(%arg0: i32, %arg1: i32, %arg2: i32, %arg3: memref<1x4x2x128xf32, #tpu.memory_space<vmem>>, %arg4: memref<1x1x2x128xi32, #tpu.memory_space<vmem>>, %arg5: memref<1x3x4x128xf32, #tpu.memory_space<vmem>>, %arg6: memref<4x2x128xf32, #tpu.memory_space<vmem>>, %arg7: memref<4x2x128xf32, #tpu.memory_space<vmem>>, %arg8: memref<4x2x128xf32, #tpu.memory_space<vmem>>) attributes {dimension_semantics = [#tpu.dimension_semantics<parallel>, #tpu.dimension_semantics<arbitrary>, #tpu.dimension_semantics<arbitrary>], iteration_bounds = array<i64: 1, 2, 1>, scalar_prefetch = 0 : i64, scratch_operands = 3 : i64, tpu.core_type = #tpu.core_type<tc>, window_params = [{transform_indices = @transform_0, window_bounds = array<i64: 1, 4, 2, 128>}, {transform_indices = @transform_1, window_bounds = array<i64: 1, 1, 2, 128>}, {transform_indices = @transform_2, window_bounds = array<i64: 1, 3, 4, 128>}]} {
    %c0_i32 = arith.constant 0 : i32
    %0 = arith.cmpi eq, %arg1, %c0_i32 : i32
    %c0_i32_0 = arith.constant 0 : i32
    %1 = arith.cmpi eq, %arg2, %c0_i32_0 : i32
    %2 = arith.andi %0, %1 : i1
    %3 = arith.extui %2 : i1 to i32
    %c0_i32_1 = arith.constant 0 : i32
    %4 = arith.cmpi ne, %3, %c0_i32_1 : i32
    scf.if %4 {
      %cst_30 = arith.constant 0.000000e+00 : f32
      %40 = vector.broadcast %cst_30 : f32 to vector<4x2x128xf32>
      %c0_31 = arith.constant 0 : index
      %c0_32 = arith.constant 0 : index
      %c0_33 = arith.constant 0 : index
      %41 = vector.load %arg6[%c0_31, %c0_32, %c0_33] : memref<4x2x128xf32, #tpu.memory_space<vmem>>, vector<4x2x128xf32>
      tpu.vector_store %arg6[%c0_31, %c0_32, %c0_33], %40 {strides = array<i32>} : memref<4x2x128xf32, #tpu.memory_space<vmem>>, vector<4x2x128xf32>,
      %cst_34 = arith.constant 0.000000e+00 : f32
      %42 = vector.broadcast %cst_34 : f32 to vector<4x2x128xf32>
      %c0_35 = arith.constant 0 : index
      %c0_36 = arith.constant 0 : index
      %c0_37 = arith.constant 0 : index
      %43 = vector.load %arg7[%c0_35, %c0_36, %c0_37] : memref<4x2x128xf32, #tpu.memory_space<vmem>>, vector<4x2x128xf32>
      tpu.vector_store %arg7[%c0_35, %c0_36, %c0_37], %42 {strides = array<i32>} : memref<4x2x128xf32, #tpu.memory_space<vmem>>, vector<4x2x128xf32>,
      %cst_38 = arith.constant 0.000000e+00 : f32
      %44 = vector.broadcast %cst_38 : f32 to vector<4x2x128xf32>
      %c0_39 = arith.constant 0 : index
      %c0_40 = arith.constant 0 : index
      %c0_41 = arith.constant 0 : index
      %45 = vector.load %arg8[%c0_39, %c0_40, %c0_41] : memref<4x2x128xf32, #tpu.memory_space<vmem>>, vector<4x2x128xf32>
      tpu.vector_store %arg8[%c0_39, %c0_40, %c0_41], %44 {strides = array<i32>} : memref<4x2x128xf32, #tpu.memory_space<vmem>>, vector<4x2x128xf32>,
    } else {
    }
    %c0 = arith.constant 0 : index
    %c0_2 = arith.constant 0 : index
    %c0_3 = arith.constant 0 : index
    %c0_4 = arith.constant 0 : index
    %5 = vector.load %arg3[%c0, %c0_2, %c0_3, %c0_4] : memref<1x4x2x128xf32, #tpu.memory_space<vmem>>, vector<1x4x2x128xf32>
    %6 = vector.shape_cast %5 : vector<1x4x2x128xf32> to vector<4x2x128xf32>
    %c0_5 = arith.constant 0 : index
    %c0_6 = arith.constant 0 : index
    %c0_7 = arith.constant 0 : index
    %c0_8 = arith.constant 0 : index
    %7 = vector.load %arg4[%c0_5, %c0_6, %c0_7, %c0_8] : memref<1x1x2x128xi32, #tpu.memory_space<vmem>>, vector<1x1x2x128xi32>
    %8 = vector.shape_cast %7 : vector<1x1x2x128xi32> to vector<1x2x128xi32>
    %cst = arith.constant dense<0xFF800000> : vector<2x128xf32>
    %9 = vector.multi_reduction <maximumf>, %6, %cst [0] : vector<4x2x128xf32> to vector<2x128xf32>
    %10 = vector.shape_cast %9 : vector<2x128xf32> to vector<1x2x128xf32>
    %11 = vector.broadcast %10 : vector<1x2x128xf32> to vector<4x2x128xf32>
    %12 = arith.subf %6, %11 : vector<4x2x128xf32>
    %13 = math.exp %12 : vector<4x2x128xf32>
    %cst_9 = arith.constant dense<0.000000e+00> : vector<2x128xf32>
    %14 = vector.multi_reduction <add>, %13, %cst_9 [0] : vector<4x2x128xf32> to vector<2x128xf32>
    %15 = vector.shape_cast %14 : vector<2x128xf32> to vector<1x2x128xf32>
    %16 = vector.broadcast %15 : vector<1x2x128xf32> to vector<4x2x128xf32>
    %17 = arith.divf %13, %16 : vector<4x2x128xf32>
    %18 = tpu.iota {dimensions = array<i32: 0>} : vector<4x1x128xi32>
    %19 = vector.broadcast %8 : vector<1x2x128xi32> to vector<4x2x128xi32>
    %20 = vector.broadcast %18 : vector<4x1x128xi32> to vector<4x2x128xi32>
    %21 = arith.cmpi eq, %19, %20 : vector<4x2x128xi32>
    %22 = arith.extui %21 : vector<4x2x128xi1> to vector<4x2x128xi32>
    %23 = arith.sitofp %22 : vector<4x2x128xi32> to vector<4x2x128xf32>
    %c0_10 = arith.constant 0 : index
    %c0_11 = arith.constant 0 : index
    %c0_12 = arith.constant 0 : index
    %24 = vector.load %arg6[%c0_10, %c0_11, %c0_12] : memref<4x2x128xf32, #tpu.memory_space<vmem>>, vector<4x2x128xf32>
    %25 = arith.mulf %17, %23 : vector<4x2x128xf32>
    %26 = arith.addf %24, %25 : vector<4x2x128xf32>
    %c0_13 = arith.constant 0 : index
    %c0_14 = arith.constant 0 : index
    %c0_15 = arith.constant 0 : index
    %27 = vector.load %arg6[%c0_13, %c0_14, %c0_15] : memref<4x2x128xf32, #tpu.memory_space<vmem>>, vector<4x2x128xf32>
    tpu.vector_store %arg6[%c0_13, %c0_14, %c0_15], %26 {strides = array<i32>} : memref<4x2x128xf32, #tpu.memory_space<vmem>>, vector<4x2x128xf32>,
    %c0_16 = arith.constant 0 : index
    %c0_17 = arith.constant 0 : index
    %c0_18 = arith.constant 0 : index
    %28 = vector.load %arg7[%c0_16, %c0_17, %c0_18] : memref<4x2x128xf32, #tpu.memory_space<vmem>>, vector<4x2x128xf32>
    %29 = arith.mulf %17, %17 : vector<4x2x128xf32>
    %30 = arith.addf %28, %29 : vector<4x2x128xf32>
    %c0_19 = arith.constant 0 : index
    %c0_20 = arith.constant 0 : index
    %c0_21 = arith.constant 0 : index
    %31 = vector.load %arg7[%c0_19, %c0_20, %c0_21] : memref<4x2x128xf32, #tpu.memory_space<vmem>>, vector<4x2x128xf32>
    tpu.vector_store %arg7[%c0_19, %c0_20, %c0_21], %30 {strides = array<i32>} : memref<4x2x128xf32, #tpu.memory_space<vmem>>, vector<4x2x128xf32>,
    %c0_22 = arith.constant 0 : index
    %c0_23 = arith.constant 0 : index
    %c0_24 = arith.constant 0 : index
    %32 = vector.load %arg8[%c0_22, %c0_23, %c0_24] : memref<4x2x128xf32, #tpu.memory_space<vmem>>, vector<4x2x128xf32>
    %33 = arith.addf %32, %23 : vector<4x2x128xf32>
    %c0_25 = arith.constant 0 : index
    %c0_26 = arith.constant 0 : index
    %c0_27 = arith.constant 0 : index
    %34 = vector.load %arg8[%c0_25, %c0_26, %c0_27] : memref<4x2x128xf32, #tpu.memory_space<vmem>>, vector<4x2x128xf32>
    tpu.vector_store %arg8[%c0_25, %c0_26, %c0_27], %33 {strides = array<i32>} : memref<4x2x128xf32, #tpu.memory_space<vmem>>, vector<4x2x128xf32>,
    %c1_i32 = arith.constant 1 : i32
    %35 = arith.cmpi eq, %arg1, %c1_i32 : i32
    %c0_i32_28 = arith.constant 0 : i32
    %36 = arith.cmpi eq, %arg2, %c0_i32_28 : i32
    %37 = arith.andi %35, %36 : i1
    %38 = arith.extui %37 : i1 to i32
    %c0_i32_29 = arith.constant 0 : i32
    %39 = arith.cmpi ne, %38, %c0_i32_29 : i32
    scf.if %39 {
      %c0_30 = arith.constant 0 : index
      %c0_31 = arith.constant 0 : index
      %c0_32 = arith.constant 0 : index
      %40 = vector.load %arg6[%c0_30, %c0_31, %c0_32] : memref<4x2x128xf32, #tpu.memory_space<vmem>>, vector<4x2x128xf32>
      %cst_33 = arith.constant dense<0.000000e+00> : vector<4x128xf32>
      %41 = vector.multi_reduction <add>, %40, %cst_33 [1] : vector<4x2x128xf32> to vector<4x128xf32>
      %c0_34 = arith.constant 0 : index
      %c0_35 = arith.constant 0 : index
      %c0_36 = arith.constant 0 : index
      %c0_37 = arith.constant 0 : index
      %42 = vector.load %arg5[%c0_34, %c0_35, %c0_36, %c0_37] : memref<1x3x4x128xf32, #tpu.memory_space<vmem>>, vector<1x1x4x128xf32>
      %43 = vector.shape_cast %42 : vector<1x1x4x128xf32> to vector<4x128xf32>
      %44 = vector.shape_cast %41 : vector<4x128xf32> to vector<1x1x4x128xf32>
      tpu.vector_store %arg5[%c0_34, %c0_35, %c0_36, %c0_37], %44 {strides = array<i32>} : memref<1x3x4x128xf32, #tpu.memory_space<vmem>>, vector<1x1x4x128xf32>,
      %c0_38 = arith.constant 0 : index
      %c0_39 = arith.constant 0 : index
      %c0_40 = arith.constant 0 : index
      %45 = vector.load %arg7[%c0_38, %c0_39, %c0_40] : memref<4x2x128xf32, #tpu.memory_space<vmem>>, vector<4x2x128xf32>
      %cst_41 = arith.constant dense<0.000000e+00> : vector<4x128xf32>
      %46 = vector.multi_reduction <add>, %45, %cst_41 [1] : vector<4x2x128xf32> to vector<4x128xf32>
      %c0_42 = arith.constant 0 : index
      %c1 = arith.constant 1 : index
      %c0_43 = arith.constant 0 : index
      %c0_44 = arith.constant 0 : index
      %47 = vector.load %arg5[%c0_42, %c1, %c0_43, %c0_44] : memref<1x3x4x128xf32, #tpu.memory_space<vmem>>, vector<1x1x4x128xf32>
      %48 = vector.shape_cast %47 : vector<1x1x4x128xf32> to vector<4x128xf32>
      %49 = vector.shape_cast %46 : vector<4x128xf32> to vector<1x1x4x128xf32>
      tpu.vector_store %arg5[%c0_42, %c1, %c0_43, %c0_44], %49 {strides = array<i32>} : memref<1x3x4x128xf32, #tpu.memory_space<vmem>>, vector<1x1x4x128xf32>,
      %c0_45 = arith.constant 0 : index
      %c0_46 = arith.constant 0 : index
      %c0_47 = arith.constant 0 : index
      %50 = vector.load %arg8[%c0_45, %c0_46, %c0_47] : memref<4x2x128xf32, #tpu.memory_space<vmem>>, vector<4x2x128xf32>
      %cst_48 = arith.constant dense<0.000000e+00> : vector<4x128xf32>
      %51 = vector.multi_reduction <add>, %50, %cst_48 [1] : vector<4x2x128xf32> to vector<4x128xf32>
      %c0_49 = arith.constant 0 : index
      %c2 = arith.constant 2 : index
      %c0_50 = arith.constant 0 : index
      %c0_51 = arith.constant 0 : index
      %52 = vector.load %arg5[%c0_49, %c2, %c0_50, %c0_51] : memref<1x3x4x128xf32, #tpu.memory_space<vmem>>, vector<1x1x4x128xf32>
      %53 = vector.shape_cast %52 : vector<1x1x4x128xf32> to vector<4x128xf32>
      %54 = vector.shape_cast %51 : vector<4x128xf32> to vector<1x1x4x128xf32>
      tpu.vector_store %arg5[%c0_49, %c2, %c0_50, %c0_51], %54 {strides = array<i32>} : memref<1x3x4x128xf32, #tpu.memory_space<vmem>>, vector<1x1x4x128xf32>,
    } else {
    }
    return
  }
  func.func @transform_0(%arg0: i32, %arg1: i32, %arg2: i32) -> (i32, i32, i32, i32) {
    %c1_i32 = arith.constant 1 : i32
    %0 = arith.muli %arg0, %c1_i32 : i32
    %1 = arith.addi %0, %arg2 : i32
    %c0_i32 = arith.constant 0 : i32
    %2 = arith.minsi %1, %c0_i32 : i32
    %c0_i32_0 = arith.constant 0 : i32
    %c0_i32_1 = arith.constant 0 : i32
    %c0_i32_2 = arith.constant 0 : i32
    return %arg1, %c0_i32_0, %2, %c0_i32_1 : i32, i32, i32, i32
  }
  func.func @transform_1(%arg0: i32, %arg1: i32, %arg2: i32) -> (i32, i32, i32, i32) {
    %c1_i32 = arith.constant 1 : i32
    %0 = arith.muli %arg0, %c1_i32 : i32
    %1 = arith.addi %0, %arg2 : i32
    %c0_i32 = arith.constant 0 : i32
    %2 = arith.minsi %1, %c0_i32 : i32
    %c0_i32_0 = arith.constant 0 : i32
    %c0_i32_1 = arith.constant 0 : i32
    %c0_i32_2 = arith.constant 0 : i32
    return %arg1, %c0_i32_0, %2, %c0_i32_1 : i32, i32, i32, i32
  }
  func.func @transform_2(%arg0: i32, %arg1: i32, %arg2: i32) -> (i32, i32, i32, i32) {
    %c0_i32 = arith.constant 0 : i32
    %c0_i32_0 = arith.constant 0 : i32
    %c0_i32_1 = arith.constant 0 : i32
    %c0_i32_2 = arith.constant 0 : i32
    return %arg0, %c0_i32, %c0_i32_0, %c0_i32_1 : i32, i32, i32, i32
  }
}

</mosaic_0001>

<llo_original>
// kernel: dice_loss.1
$region0: #{dice_loss.1}
  #allocation0 [shape = 'u32[]', space=smem, size = 0x4, offset = 0x4, fixed_abs, tag = 'smem constant byte address 0x4 - core index']
  #allocation1 [shape = 'u32[72,128]{1,0:T(1,128)}', space=vmem, size = 0x9000, scoped, tag = 'internal scratch']
  #allocation2 [shape = 'f32[4,2,128]{2,1,0:T(2,128)}', space=vmem, size = 0x1000, scoped, tag = 'scratch operand']
  #allocation3 [shape = 'f32[4,2,128]{2,1,0:T(2,128)}', space=vmem, size = 0x1000, scoped, tag = 'scratch operand']
  #allocation4 [shape = 'f32[4,2,128]{2,1,0:T(2,128)}', space=vmem, size = 0x1000, scoped, tag = 'scratch operand']
  %s0 = inlined_call_operand.vmem [shape: f32[2,4,2,128], index: 0, kind: input, shape index: {}]
  %s1 = inlined_call_operand.vmem [shape: s32[2,1,2,128], index: 1, kind: input, shape index: {}]
  %s2 = inlined_call_operand.vmem [shape: f32[1,3,4,128], index: 2, kind: output, shape index: {}]
  %s3 = sld [smem:[#allocation0]]
  $region49: #{dice_loss.1} parent=0
    _
  %s5 = ssub.s32 1, %s3
  %s6 = scalar_select 0, %s5, %s3
  loop: start=0, step=1, limit=4
  $region2: #{dice_loss.1} parent=0 // loop_pre_header
    _
  $region3: #{dice_loss.1} parent=0 // loop_header
    %s8 = sphi 0, %s12
    %p9 = scmp.ge.s32.totalorder %s8, 4
    %s15 = sphi 0, %s34
    %s16 = sphi 0, %s30
    %s17 = sphi 0, %s26
    %s18 = sphi 0, %s15
    %s19 = sphi 0, %s16
    %s20 = sphi 0, %s17
    %s21 = sphi 0, %s18
    %s22 = sphi 0, %s19
    %s23 = sphi 0, %s20
    %s45 = sphi 0, %s47
    %s48 = sphi 0, %s45
    %s49 = sphi 0, %s48
    %s65 = sphi 0, %s49
    %s79 = sphi 0, %s81
    %s82 = sphi 0, %s79
    %s83 = sphi 0, %s82
    %s99 = sphi 0, %s83
    %s105 = sphi 0, %s107
    %s108 = sphi 0, %s105
    %s109 = sphi 0, %s108
    %s125 = sphi 0, %s109
  $region4: #{dice_loss.1} parent=0 // loop_header_branch
    %11 = sbr.rel (%p9) target = $region8
  $region5: #{dice_loss.1} parent=0 // loop_body
    %s13 = ssub.s32 %s8, 1
    %s14 = ssub.s32 %s8, 2
    %s24 = sadd.s32 1, %s17
    %p25 = scmp.ge.s32.totalorder %s24, 1
    %s26 = scalar_select %p25, 0, %s24
    %s27 = sadd.s32 1, %s16
    %s28 = scalar_select %p25, %s27, %s16
    %p29 = scmp.ge.s32.totalorder %s28, 2
    %s30 = scalar_select %p29, 0, %s28
    %s31 = sadd.s32 1, %s15
    %s32 = scalar_select %p29, %s31, %s15
    %p33 = scmp.ge.s32.totalorder %s32, 1
    %s34 = scalar_select %p33, 0, %s32
    %s35 = sadd.s32 %s15, %s17
    %p36 = scmp.lt.s32.totalorder %s35, 0
    %s37 = scalar_select %p36, %s35, 0
    %s38 = sadd.s32 %s34, %s26
    %p39 = scmp.lt.s32.totalorder %s38, 0
    %s40 = scalar_select %p39, %s38, 0
    %s41 = ssub.s32 %s16, %s30
    %s42 = ssub.s32 %s37, %s40
    %s43 = sor.u32 %s41, %s42
    %p44 = scmp.eq.s32.totalorder %s43, 0
    %s46 = sadd.s32 %s45, 1
    %s47 = scalar_select %p44, %s45, %s46
    %p50 = pneg %p44
    %p51 = scmp.eq.s32.totalorder %s8, 1
    %p52 = por %p50, %p51
    %p53 = scmp.ne.s32.totalorder %s45, %s48
    %p54 = scmp.eq.s32.totalorder %s8, 0
    %p55 = por %p53, %p54
    %p56 = scmp.ne.s32.totalorder %s45, %s48
    %p57 = scmp.eq.s32.totalorder %s13, 1
    %p58 = por %p56, %p57
    %p59 = scmp.ne.s32.totalorder %s48, %s49
    %p60 = scmp.eq.s32.totalorder %s13, 0
    %p61 = por %p59, %p60
    %p62 = scmp.ne.s32.totalorder %s48, %s49
    %p63 = scmp.eq.s32.totalorder %s14, 1
    %p64 = por %p62, %p63
    %p66 = scmp.ne.s32.totalorder %s49, %s65
    %p67 = scmp.eq.s32.totalorder %s14, 0
    %p68 = por %p66, %p67
    %s69 = sadd.s32 %s15, %s17
    %p70 = scmp.lt.s32.totalorder %s69, 0
    %s71 = scalar_select %p70, %s69, 0
    %s72 = sadd.s32 %s34, %s26
    %p73 = scmp.lt.s32.totalorder %s72, 0
    %s74 = scalar_select %p73, %s72, 0
    %s75 = ssub.s32 %s16, %s30
    %s76 = ssub.s32 %s71, %s74
    %s77 = sor.u32 %s75, %s76
    %p78 = scmp.eq.s32.totalorder %s77, 0
    %s80 = sadd.s32 %s79, 1
    %s81 = scalar_select %p78, %s79, %s80
    %p84 = pneg %p78
    %p85 = scmp.eq.s32.totalorder %s8, 1
    %p86 = por %p84, %p85
    %p87 = scmp.ne.s32.totalorder %s79, %s82
    %p88 = scmp.eq.s32.totalorder %s8, 0
    %p89 = por %p87, %p88
    %p90 = scmp.ne.s32.totalorder %s79, %s82
    %p91 = scmp.eq.s32.totalorder %s13, 1
    %p92 = por %p90, %p91
    %p93 = scmp.ne.s32.totalorder %s82, %s83
    %p94 = scmp.eq.s32.totalorder %s13, 0
    %p95 = por %p93, %p94
    %p96 = scmp.ne.s32.totalorder %s82, %s83
    %p97 = scmp.eq.s32.totalorder %s14, 1
    %p98 = por %p96, %p97
    %p100 = scmp.ne.s32.totalorder %s83, %s99
    %p101 = scmp.eq.s32.totalorder %s14, 0
    %p102 = por %p100, %p101
    %s103 = ssub.s32 %s15, %s34
    %p104 = scmp.eq.s32.totalorder %s103, 0
    %s106 = sadd.s32 %s105, 1
    %s107 = scalar_select %p104, %s105, %s106
    %p110 = pneg %p104
    %p111 = scmp.eq.s32.totalorder %s8, 1
    %p112 = por %p110, %p111
    %p113 = scmp.ne.s32.totalorder %s105, %s108
    %p114 = scmp.eq.s32.totalorder %s8, 0
    %p115 = por %p113, %p114
    %p116 = scmp.ne.s32.totalorder %s105, %s108
    %p117 = scmp.eq.s32.totalorder %s13, 1
    %p118 = por %p116, %p117
    %p119 = scmp.ne.s32.totalorder %s108, %s109
    %p120 = scmp.eq.s32.totalorder %s13, 0
    %p121 = por %p119, %p120
    %p122 = scmp.ne.s32.totalorder %s108, %s109
    %p123 = scmp.eq.s32.totalorder %s14, 1
    %p124 = por %p122, %p123
    %p126 = scmp.ne.s32.totalorder %s109, %s125
    %p127 = scmp.eq.s32.totalorder %s14, 0
    %p128 = por %p126, %p127
    %p129 = scmp.le.s32.totalorder 1, %s8
    %p130 = scmp.lt.s32.totalorder %s8, 3
    %p131 = pnand %p129, %p130
    %p132 = pneg %p131
    // Predicated region
    $region9: #{dice_loss.1} parent=5 // pred_check
      _
    $region10: #{dice_loss.1} parent=5 // pred_check_branch
      %134 = sbr.rel (%p131) target = $region12
    $region11: #{dice_loss.1} parent=5 // pred_region
      %s135 = ssub.s32 %s8, 1
    $region12: #{dice_loss.1} parent=5 // pred_fallthru
      _
    %p136 = scmp.lt.s32.totalorder %s8, 2
    // Predicated region
    $region13: #{dice_loss.1} parent=5 // pred_check
      %p137 = pneg %p136
    $region14: #{dice_loss.1} parent=5 // pred_check_branch
      %139 = sbr.rel (%p137) target = $region16
    $region15: #{dice_loss.1} parent=5 // pred_region
      // Predicated region
      $region17: #{dice_loss.1} parent=15 // pred_check
        %p140 = pneg %p55
      $region18: #{dice_loss.1} parent=15 // pred_check_branch
        %142 = sbr.rel (%p140) target = $region20
      $region19: #{dice_loss.1} parent=15 // pred_region
        %s143 = sadd.s32 %s15, %s17
        %p144 = scmp.lt.s32.totalorder %s143, 0
        %s145 = scalar_select %p144, %s143, 0
        %p146 = scmp.lt.s32.totalorder %s16, 1
        %s147 = scalar_select %p146, %s16, 1
        %p148 = scmp.lt.s32.totalorder %s145, 0
        %s149 = scalar_select %p148, %s145, 0
        %s150 = smul.addr %s147, 4
        %s151 = sadd.s32 %s149, %s150
        %s152 = smul.addr %s151, 2
        %s153 = scalar_lea.vmem %s0, %s152
        %s154 = sadd.s32 %s15, %s17
        %p155 = scmp.lt.s32.totalorder %s154, 0
        %s156 = scalar_select %p155, %s154, 0
      $region20: #{dice_loss.1} parent=15 // pred_fallthru
        _
      // Predicated region
      $region21: #{dice_loss.1} parent=15 // pred_check
        %p157 = pneg %p89
      $region22: #{dice_loss.1} parent=15 // pred_check_branch
        %159 = sbr.rel (%p157) target = $region24
      $region23: #{dice_loss.1} parent=15 // pred_region
        %s160 = sadd.s32 %s15, %s17
        %p161 = scmp.lt.s32.totalorder %s160, 0
        %s162 = scalar_select %p161, %s160, 0
        %p163 = scmp.lt.s32.totalorder %s16, 1
        %s164 = scalar_select %p163, %s16, 1
        %p165 = scmp.lt.s32.totalorder %s162, 0
        %s166 = scalar_select %p165, %s162, 0
        %s167 = sadd.s32 %s166, %s164
        %s168 = smul.addr %s167, 2
        %s169 = scalar_lea.vmem %s1, %s168
        %s170 = sadd.s32 %s15, %s17
        %p171 = scmp.lt.s32.totalorder %s170, 0
        %s172 = scalar_select %p171, %s170, 0
      $region24: #{dice_loss.1} parent=15 // pred_fallthru
        _
    $region16: #{dice_loss.1} parent=5 // pred_fallthru
      _
    %p173 = scmp.le.s32.totalorder 1, %s8
    %p174 = scmp.lt.s32.totalorder %s8, 3
    %p175 = pnand %p173, %p174
    %p176 = pneg %p175
    // Predicated region
    $region25: #{dice_loss.1} parent=5 // pred_check
      _
    $region26: #{dice_loss.1} parent=5 // pred_check_branch
      %178 = sbr.rel (%p175) target = $region28
    $region27: #{dice_loss.1} parent=5 // pred_region
      %s179 = ssub.s32 %s8, 1
      %s180 = sadd.s32 %s18, %s20
      %p181 = scmp.lt.s32.totalorder %s180, 0
      %s182 = scalar_select %p181, %s180, 0
      %p183 = scmp.lt.s32.totalorder %s19, 1
      %s184 = scalar_select %p183, %s19, 1
      %p185 = scmp.lt.s32.totalorder %s182, 0
      %s186 = scalar_select %p185, %s182, 0
      %s187 = smul.addr %s184, 4
      %s188 = sadd.s32 %s186, %s187
      %s189 = smul.addr %s188, 2
      %s190 = scalar_lea.vmem %s0, %s189
      %p191 = pneg %p61
      %p192 = pneg %p58
      %s193 = sadd.s32 %s18, %s20
      %p194 = scmp.lt.s32.totalorder %s193, 0
      %s195 = scalar_select %p194, %s193, 0
      %p196 = scmp.lt.s32.totalorder %s19, 1
      %s197 = scalar_select %p196, %s19, 1
      %p198 = scmp.lt.s32.totalorder %s195, 0
      %s199 = scalar_select %p198, %s195, 0
      %s200 = sadd.s32 %s199, %s197
      %s201 = smul.addr %s200, 2
      %s202 = scalar_lea.vmem %s1, %s201
      %p203 = pneg %p95
      %p204 = pneg %p92
      %p205 = pneg %p121
      %p206 = pneg %p118
      %p207 = scmp.lt.s32.totalorder %s18, 0
      %s208 = scalar_select %p207, %s18, 0
      %s209 = smul.addr %s208, 3
      %s210 = smul.addr %s209, 4
      %s211 = scalar_lea.vmem %s2, %s210
      %s212 = sadd.s32 %s18, %s20
      %p213 = scmp.lt.s32.totalorder %s212, 0
      %s214 = scalar_select %p213, %s212, 0
      %p215 = scmp.lt.s32.totalorder %s19, 1
      %s216 = scalar_select %p215, %s19, 1
      %p217 = scmp.lt.s32.totalorder %s214, 0
      %s218 = scalar_select %p217, %s214, 0
      %s219 = smul.addr %s216, 4
      %s220 = sadd.s32 %s218, %s219
      %s221 = smul.addr %s220, 2
      %s222 = scalar_lea.vmem %s0, %s221
      %s223 = sadd.s32 %s18, %s20
      %p224 = scmp.lt.s32.totalorder %s223, 0
      %s225 = scalar_select %p224, %s223, 0
      %s226 = sadd.s32 %s18, %s20
      %p227 = scmp.lt.s32.totalorder %s226, 0
      %s228 = scalar_select %p227, %s226, 0
      %p229 = scmp.lt.s32.totalorder %s19, 1
      %s230 = scalar_select %p229, %s19, 1
      %p231 = scmp.lt.s32.totalorder %s228, 0
      %s232 = scalar_select %p231, %s228, 0
      %s233 = sadd.s32 %s232, %s230
      %s234 = smul.addr %s233, 2
      %s235 = scalar_lea.vmem %s1, %s234
      %s236 = sadd.s32 %s18, %s20
      %p237 = scmp.lt.s32.totalorder %s236, 0
      %s238 = scalar_select %p237, %s236, 0
      %p239 = scmp.lt.s32.totalorder %s18, 0
      %s240 = scalar_select %p239, %s18, 0
      %s241 = smul.addr %s240, 3
      %s242 = smul.addr %s241, 4
      %s243 = scalar_lea.vmem %s2, %s242
      %p244 = scmp.eq.s32.totalorder %s19, 0
      %p245 = scmp.eq.s32.totalorder %s20, 0
      %p246 = pnand %p244, %p245
      %p247 = pneg %p246
      // Predicated region
      $region29: #{dice_loss.1} parent=27 // pred_check
        _
      $region30: #{dice_loss.1} parent=27 // pred_check_branch
        %249 = sbr.rel (%p246) target = $region32
      $region31: #{dice_loss.1} parent=27 // pred_region
        %250 = vst [vmem:[#allocation2] sm:$0x3] 0.0
        %251 = vst [vmem:[#allocation2 + $0x2] sm:$0x3] 0.0
        %252 = vst [vmem:[#allocation2 + $0x4] sm:$0x3] 0.0
        %253 = vst [vmem:[#allocation2 + $0x6] sm:$0x3] 0.0
        %254 = vst [vmem:[#allocation3] sm:$0x3] 0.0
        %255 = vst [vmem:[#allocation3 + $0x2] sm:$0x3] 0.0
        %256 = vst [vmem:[#allocation3 + $0x4] sm:$0x3] 0.0
        %257 = vst [vmem:[#allocation3 + $0x6] sm:$0x3] 0.0
        %258 = vst [vmem:[#allocation4] sm:$0x3] 0.0
        %259 = vst [vmem:[#allocation4 + $0x2] sm:$0x3] 0.0
        %260 = vst [vmem:[#allocation4 + $0x4] sm:$0x3] 0.0
        %261 = vst [vmem:[#allocation4 + $0x6] sm:$0x3] 0.0
      $region32: #{dice_loss.1} parent=27 // pred_fallthru
        _
      %v262 = vld [vmem:[%s222] sm:$0x3]
      %v263 = vld [vmem:[%s222 + $0x2] sm:$0x3]
      %v264 = vld [vmem:[%s222 + $0x4] sm:$0x3]
      %v265 = vld [vmem:[%s222 + $0x6] sm:$0x3]
      %v266 = vld [vmem:[%s235] sm:$0x3]
      %vm267 = vcmask 1041408
      %v268 = vsel %vm267, %v262, -inf
      %v269 = vsel %vm267, %v263, -inf
      %v270 = vsel %vm267, %v264, -inf
      %v271 = vsel %vm267, %v265, -inf
      %v272 = vmax.f32 %v268, %v269
      %v273 = vmax.f32 %v270, %v271
      %v274 = vmax.f32 %v272, %v273
      %v275 = vsub.f32 %v262, %v274
      %v276 = vsub.f32 %v263, %v274
      %v277 = vsub.f32 %v264, %v274
      %v278 = vsub.f32 %v265, %v274
      %v279 = vmul.f32 %v275, 1.442695
      %v280 = vpow.pop %v279
      %v281 = vmul.f32 %v276, 1.442695
      %v282 = vpow.pop %v281
      %v283 = vmul.f32 %v277, 1.442695
      %v284 = vpow.pop %v283
      %v285 = vmul.f32 %v278, 1.442695
      %v286 = vpow.pop %v285
      %v287 = vsel %vm267, %v280, 0.0
      %v288 = vsel %vm267, %v282, 0.0
      %v289 = vadd.f32 %v287, %v288
      %v290 = vsel %vm267, %v284, 0.0
      %v291 = vadd.f32 %v289, %v290
      %v292 = vsel %vm267, %v286, 0.0
      %v293 = vadd.f32 %v291, %v292
      %v294 = vrcp.pop %v293
      %v295 = vmul.f32 %v293, %v294
      %v296 = vsub.f32 1.0, %v295
      %v297 = vmul.f32 %v294, %v296
      %v298 = vadd.f32 %v294, %v297
      %vm299 = vweird.f32 %v293
      %vm300 = vweird.f32 %v294
      %vm301 = vmor %vm299, %vm300
      %v302 = vsel %vm301, %v294, %v298
      %v303 = vand.u32 2147483647, %v293
      %vm304 = vcmp.eq.f32.partialorder %v303, 8.507059e+37
      %v305 = vand.u32 %v293, 2147483648
      %v306 = vor.u32 1.1754944e-38, %v305
      %v307 = vsel %vm304, %v306, %v302
      %v308 = vmul.f32 %v280, %v307
      %v309 = vmul.f32 %v282, %v307
      %v310 = vmul.f32 %v284, %v307
      %v311 = vmul.f32 %v286, %v307
      %vm312 = vcmp.eq.s32.totalorder %v266, 0
      %vm313 = vcmp.eq.s32.totalorder %v266, 1
      %vm314 = vcmp.eq.s32.totalorder %v266, 2
      %vm315 = vcmp.eq.s32.totalorder %v266, 3
      %v316 = vsel %vm312, 1, 0
      %v317 = vsel %vm313, 1, 0
      %v318 = vsel %vm314, 1, 0
      %v319 = vsel %vm315, 1, 0
      %v320 = vcvt.s32.f32 %v316
      %v321 = vcvt.s32.f32 %v317
      %v322 = vcvt.s32.f32 %v318
      %v323 = vcvt.s32.f32 %v319
      %v324 = vld [vmem:[#allocation2] sm:$0x3]
      %v325 = vld [vmem:[#allocation2 + $0x2] sm:$0x3]
      %v326 = vld [vmem:[#allocation2 + $0x4] sm:$0x3]
      %v327 = vld [vmem:[#allocation2 + $0x6] sm:$0x3]
      %v328 = vmul.f32 %v308, %v320
      %v329 = vmul.f32 %v309, %v321
      %v330 = vmul.f32 %v310, %v322
      %v331 = vmul.f32 %v311, %v323
      %v332 = vadd.f32 %v324, %v328
      %v333 = vadd.f32 %v325, %v329
      %v334 = vadd.f32 %v326, %v330
      %v335 = vadd.f32 %v327, %v331
      %336 = vst [vmem:[#allocation2] sm:$0x3] %v332
      %337 = vst [vmem:[#allocation2 + $0x2] sm:$0x3] %v333
      %338 = vst [vmem:[#allocation2 + $0x4] sm:$0x3] %v334
      %339 = vst [vmem:[#allocation2 + $0x6] sm:$0x3] %v335
      %v340 = vld [vmem:[#allocation3] sm:$0x3]
      %v341 = vld [vmem:[#allocation3 + $0x2] sm:$0x3]
      %v342 = vld [vmem:[#allocation3 + $0x4] sm:$0x3]
      %v343 = vld [vmem:[#allocation3 + $0x6] sm:$0x3]
      %v344 = vmul.f32 %v308, %v308
      %v345 = vmul.f32 %v309, %v309
      %v346 = vmul.f32 %v310, %v310
      %v347 = vmul.f32 %v311, %v311
      %v348 = vadd.f32 %v340, %v344
      %v349 = vadd.f32 %v341, %v345
      %v350 = vadd.f32 %v342, %v346
      %v351 = vadd.f32 %v343, %v347
      %352 = vst [vmem:[#allocation3] sm:$0x3] %v348
      %353 = vst [vmem:[#allocation3 + $0x2] sm:$0x3] %v349
      %354 = vst [vmem:[#allocation3 + $0x4] sm:$0x3] %v350
      %355 = vst [vmem:[#allocation3 + $0x6] sm:$0x3] %v351
      %v356 = vld [vmem:[#allocation4] sm:$0x3]
      %v357 = vld [vmem:[#allocation4 + $0x2] sm:$0x3]
      %v358 = vld [vmem:[#allocation4 + $0x4] sm:$0x3]
      %v359 = vld [vmem:[#allocation4 + $0x6] sm:$0x3]
      %v360 = vadd.f32 %v356, %v320
      %v361 = vadd.f32 %v357, %v321
      %v362 = vadd.f32 %v358, %v322
      %v363 = vadd.f32 %v359, %v323
      %364 = vst [vmem:[#allocation4] sm:$0x3] %v360
      %365 = vst [vmem:[#allocation4 + $0x2] sm:$0x3] %v361
      %366 = vst [vmem:[#allocation4 + $0x4] sm:$0x3] %v362
      %367 = vst [vmem:[#allocation4 + $0x6] sm:$0x3] %v363
      %p368 = scmp.eq.s32.totalorder %s19, 1
      %p369 = pnand %p368, %p245
      %p370 = pneg %p369
      // Predicated region
      $region33: #{dice_loss.1} parent=27 // pred_check
        _
      $region34: #{dice_loss.1} parent=27 // pred_check_branch
        %372 = sbr.rel (%p369) target = $region36
      $region35: #{dice_loss.1} parent=27 // pred_region
        %v373 = vld [vmem:[#allocation2] sm:$0x3]
        %v374 = vld [vmem:[#allocation2 + $0x2] sm:$0x3]
        %v375 = vld [vmem:[#allocation2 + $0x4] sm:$0x3]
        %v376 = vld [vmem:[#allocation2 + $0x6] sm:$0x3]
        %v377 = vsel %vm267, %v373, 0.0
        %v378 = vrot.slane %v377, 4
        %v379 = vadd.f32 %v377, %v378
        %v380 = vrot.slane %v379, 2
        %v381 = vadd.f32 %v379, %v380
        %v382 = vrot.slane %v381, 1
        %v383 = vadd.f32 %v381, %v382
        %v384 = vsel %vm267, %v374, 0.0
        %v385 = vrot.slane %v384, 4
        %v386 = vadd.f32 %v384, %v385
        %v387 = vrot.slane %v386, 2
        %v388 = vadd.f32 %v386, %v387
        %v389 = vrot.slane %v388, 1
        %v390 = vadd.f32 %v388, %v389
        %v391 = vsel %vm267, %v375, 0.0
        %v392 = vrot.slane %v391, 4
        %v393 = vadd.f32 %v391, %v392
        %v394 = vrot.slane %v393, 2
        %v395 = vadd.f32 %v393, %v394
        %v396 = vrot.slane %v395, 1
        %v397 = vadd.f32 %v395, %v396
        %v398 = vsel %vm267, %v376, 0.0
        %v399 = vrot.slane %v398, 4
        %v400 = vadd.f32 %v398, %v399
        %v401 = vrot.slane %v400, 2
        %v402 = vadd.f32 %v400, %v401
        %v403 = vrot.slane %v402, 1
        %v404 = vadd.f32 %v402, %v403
        %vm409 = vcmask 1041409
        %v410 = vsel %vm409, %v390, %v383
        %vm411 = vcmask 1042434
        %v412 = vsel %vm411, %v397, %v410
        %vm413 = vcmask 1043459
        %v414 = vsel %vm413, %v404, %v412
        %416 = vst [vmem:[%s243] sm:$0xf] %v414
        %v417 = vld [vmem:[#allocation3] sm:$0x3]
        %v418 = vld [vmem:[#allocation3 + $0x2] sm:$0x3]
        %v419 = vld [vmem:[#allocation3 + $0x4] sm:$0x3]
        %v420 = vld [vmem:[#allocation3 + $0x6] sm:$0x3]
        %v421 = vsel %vm267, %v417, 0.0
        %v422 = vrot.slane %v421, 4
        %v423 = vadd.f32 %v421, %v422
        %v424 = vrot.slane %v423, 2
        %v425 = vadd.f32 %v423, %v424
        %v426 = vrot.slane %v425, 1
        %v427 = vadd.f32 %v425, %v426
        %v428 = vsel %vm267, %v418, 0.0
        %v429 = vrot.slane %v428, 4
        %v430 = vadd.f32 %v428, %v429
        %v431 = vrot.slane %v430, 2
        %v432 = vadd.f32 %v430, %v431
        %v433 = vrot.slane %v432, 1
        %v434 = vadd.f32 %v432, %v433
        %v435 = vsel %vm267, %v419, 0.0
        %v436 = vrot.slane %v435, 4
        %v437 = vadd.f32 %v435, %v436
        %v438 = vrot.slane %v437, 2
        %v439 = vadd.f32 %v437, %v438
        %v440 = vrot.slane %v439, 1
        %v441 = vadd.f32 %v439, %v440
        %v442 = vsel %vm267, %v420, 0.0
        %v443 = vrot.slane %v442, 4
        %v444 = vadd.f32 %v442, %v443
        %v445 = vrot.slane %v444, 2
        %v446 = vadd.f32 %v444, %v445
        %v447 = vrot.slane %v446, 1
        %v448 = vadd.f32 %v446, %v447
        %v453 = vsel %vm409, %v434, %v427
        %v454 = vsel %vm411, %v441, %v453
        %v455 = vsel %vm413, %v448, %v454
        %s457 = scalar_lea.vmem %s243, 4
        %458 = vst [vmem:[%s457] sm:$0xf] %v455
        %v459 = vld [vmem:[#allocation4] sm:$0x3]
        %v460 = vld [vmem:[#allocation4 + $0x2] sm:$0x3]
        %v461 = vld [vmem:[#allocation4 + $0x4] sm:$0x3]
        %v462 = vld [vmem:[#allocation4 + $0x6] sm:$0x3]
        %v463 = vsel %vm267, %v459, 0.0
        %v464 = vrot.slane %v463, 4
        %v465 = vadd.f32 %v463, %v464
        %v466 = vrot.slane %v465, 2
        %v467 = vadd.f32 %v465, %v466
        %v468 = vrot.slane %v467, 1
        %v469 = vadd.f32 %v467, %v468
        %v470 = vsel %vm267, %v460, 0.0
        %v471 = vrot.slane %v470, 4
        %v472 = vadd.f32 %v470, %v471
        %v473 = vrot.slane %v472, 2
        %v474 = vadd.f32 %v472, %v473
        %v475 = vrot.slane %v474, 1
        %v476 = vadd.f32 %v474, %v475
        %v477 = vsel %vm267, %v461, 0.0
        %v478 = vrot.slane %v477, 4
        %v479 = vadd.f32 %v477, %v478
        %v480 = vrot.slane %v479, 2
        %v481 = vadd.f32 %v479, %v480
        %v482 = vrot.slane %v481, 1
        %v483 = vadd.f32 %v481, %v482
        %v484 = vsel %vm267, %v462, 0.0
        %v485 = vrot.slane %v484, 4
        %v486 = vadd.f32 %v484, %v485
        %v487 = vrot.slane %v486, 2
        %v488 = vadd.f32 %v486, %v487
        %v489 = vrot.slane %v488, 1
        %v490 = vadd.f32 %v488, %v489
        %v495 = vsel %vm409, %v476, %v469
        %v496 = vsel %vm411, %v483, %v495
        %v497 = vsel %vm413, %v490, %v496
        %s499 = scalar_lea.vmem %s243, 8
        %500 = vst [vmem:[%s499] sm:$0xf] %v497
      $region36: #{dice_loss.1} parent=27 // pred_fallthru
        _
      %p501 = scmp.lt.s32.totalorder %s18, 0
      %s502 = scalar_select %p501, %s18, 0
      %s503 = smul.addr %s502, 3
      %s504 = smul.addr %s503, 4
      %s505 = scalar_lea.vmem %s2, %s504
      // Predicated region
      $region37: #{dice_loss.1} parent=27 // pred_check
        %p506 = pneg %p118
      $region38: #{dice_loss.1} parent=27 // pred_check_branch
        %508 = sbr.rel (%p506) target = $region40
      $region39: #{dice_loss.1} parent=27 // pred_region
        _
      $region40: #{dice_loss.1} parent=27 // pred_fallthru
        _
      // Predicated region
      $region41: #{dice_loss.1} parent=27 // pred_check
        %p509 = pneg %p118
      $region42: #{dice_loss.1} parent=27 // pred_check_branch
        %511 = sbr.rel (%p509) target = $region44
      $region43: #{dice_loss.1} parent=27 // pred_region
        %p512 = scmp.lt.s32.totalorder %s18, 0
        %s513 = scalar_select %p512, %s18, 0
        %s514 = smul.addr %s513, 3
        %s515 = smul.addr %s514, 4
        %s516 = scalar_lea.vmem %s2, %s515
      $region44: #{dice_loss.1} parent=27 // pred_fallthru
        _
    $region28: #{dice_loss.1} parent=5 // pred_fallthru
      _
    %p517 = scmp.le.s32.totalorder 2, %s8
    // Predicated region
    $region45: #{dice_loss.1} parent=5 // pred_check
      %p518 = pneg %p517
    $region46: #{dice_loss.1} parent=5 // pred_check_branch
      %520 = sbr.rel (%p518) target = $region48
    $region47: #{dice_loss.1} parent=5 // pred_region
      %s521 = ssub.s32 %s8, 2
    $region48: #{dice_loss.1} parent=5 // pred_fallthru
      _
  $region6: #{dice_loss.1} parent=0 // loop_footer
    %s12 = sadd.s32 1, %s8
  $region7: #{dice_loss.1} parent=0 // loop_footer_branch
    %7 = sbr.rel target = $region3
  $region8: #{dice_loss.1} parent=0 // loop_exit
    _

</llo_original>
